<compile_context>
chip_gen: v6e
topology: v6e:2x2x1
jax: 0.10.0
libtpu: 0.0.40
codegen_flags: <defaults>
</compile_context>

<pallas_src>
import jax
import jax.numpy as jnp
from jax.experimental import pallas as pl
from jax.experimental.pallas import tpu as pltpu


def _pick_tile_h(H, W, Cin, budget_bytes=1 << 20):
    """Row-strip height TH: H % TH == 0, output strip lane-aligned
    (TH*W % 128 == 0), and the bf16 input strip (TH + 4 halo/guard rows) under
    `budget_bytes`.  Prefers >= 2 strips so the (batch x strips) grid can shard
    across the two v7x TensorCores."""
    cands = [th for th in range(1, H + 1)
             if H % th == 0 and (th * W) % 128 == 0
             and Cin * (th + 4) * W * 2 <= budget_bytes]
    if not cands:
        return H            # tiny images: single whole-image block (still legal)
    multi = [th for th in cands if th < H]
    return max(multi) if multi else max(cands)


@jax.jit
def _engine_forward(x_nchw, w_lhs, bias_col):
    """Synthetic 'engine': 3x3 SAME conv + bias + ReLU, NCHW in / NCHW out."""
    N, Cin, H, W = x_nchw.shape
    Cout = w_lhs.shape[0]
    TH = _pick_tile_h(H, W, Cin)
    nT = H // TH
    L = TH * W                    # flattened output strip (lane axis, mult of 128)
    Le = (TH + 4) * W             # flattened input strip incl. halo + guard rows

    # f32 -> bf16 cast fused (by XLA) with the 2-row vertical zero pad and the
    # overlapping strip gather, so the SAME-padding does not add a separate
    # full-image HBM round trip on top of the mandatory cast.
    x_bf = x_nchw.astype(jnp.bfloat16)
    x_pad = jnp.pad(x_bf, ((0, 0), (0, 0), (2, 2), (0, 0)))
    strips = jnp.stack(
        [x_pad[:, :, t * TH: t * TH + TH + 4, :] for t in range(nT)], axis=1,
    ).reshape(N, nT, Cin, Le)

    def kernel(xs_ref, w_ref, b_ref, o_ref):
        # xs_ref: (1, 1, Cin, Le) bf16   row strip + halo, rows flattened onto lanes
        # w_ref : (Cout, 9*Cin)   bf16   pre-flattened conv weight
        # b_ref : (Cout, 1)       f32    bias (broadcasts along lanes)
        # o_ref : (1, Cout, L)    f32    lane-dense output strip
        xs = xs_ref[0, 0, :, :]                               # (Cin, Le)

        # Horizontal-boundary masks: in the flattened layout the left/right taps
        # wrap across rows, so they must be zeroed at x == 0 / x == W-1.
        xpos = jax.lax.broadcasted_iota(jnp.int32, (1, L), 1) % W
        not_left = xpos != 0
        not_right = xpos != (W - 1)

        # im2col: 9 taps = 9 static lane-shift slices of the strip; vertical
        # halo rows are pre-zeroed padding, horizontal edges are masked.
        slabs = []
        for dy in range(3):
            for dx in range(3):
                off = (dy + 1) * W + dx - 1                   # >= W-1, end <= Le
                slab = xs[:, off: off + L]                    # (Cin, L)
                if dx == 0:
                    slab = jnp.where(not_left, slab, 0)
                elif dx == 2:
                    slab = jnp.where(not_right, slab, 0)
                slabs.append(slab)
        im2col = jnp.concatenate(slabs, axis=0)               # (9*Cin, L) bf16

        # One MXU matmul (K = 9*Cin) with f32 accumulation; bias + ReLU on VPU.
        acc = jnp.dot(w_ref[...], im2col,
                      preferred_element_type=jnp.float32)     # (Cout, L) f32
        acc = jnp.maximum(acc + b_ref[...], 0.0)
        o_ref[...] = acc.reshape(o_ref.shape).astype(o_ref.dtype)

    out_flat = pl.pallas_call(
        kernel,
        out_shape=jax.ShapeDtypeStruct((N, Cout, H * W), jnp.float32),
        grid_spec=pltpu.PrefetchScalarGridSpec(
            num_scalar_prefetch=0,
            grid=(N, nT),
            in_specs=[
                pl.BlockSpec((1, 1, Cin, Le), lambda n, t: (n, t, 0, 0)),
                pl.BlockSpec((Cout, 9 * Cin), lambda n, t: (0, 0)),
                pl.BlockSpec((Cout, 1), lambda n, t: (0, 0)),
            ],
            out_specs=pl.BlockSpec((1, Cout, L), lambda n, t: (n, 0, t)),
        ),
        compiler_params=pltpu.CompilerParams(
            dimension_semantics=("parallel", "parallel"),
            vmem_limit_bytes=32 * 1024 * 1024,
        ),
    )(strips, w_lhs, bias_col)

    return out_flat.reshape(N, Cout, H, W)


class TensorRTModelPallas:
    """Pallas/TPU analogue of TensorRTModel (TensorRT engine wrapper)."""

    def __init__(self, input_names=("img",), output_names=("dets",),
                 in_channels=4, out_channels=8, seed=0):
        self.input_names = list(input_names)
        self.output_names = list(output_names)
        kw, kb = jax.random.split(jax.random.PRNGKey(seed))
        # Deterministic synthetic "engine" parameters (HWIO conv weight + bias).
        self.w_hwio = jax.random.normal(
            kw, (3, 3, in_channels, out_channels), dtype=jnp.float32) * 0.1
        self.bias = jax.random.normal(
            kb, (out_channels,), dtype=jnp.float32) * 0.1
        # MXU-friendly operands: pre-flattened (Cout, 9*Cin) bf16 weight whose
        # K ordering matches the kernel's im2col (dy, dx, ci), plus (Cout, 1) bias.
        self.w_lhs = jnp.transpose(self.w_hwio, (3, 0, 1, 2)).reshape(
            out_channels, 9 * in_channels).astype(jnp.bfloat16)
        self.bias_col = self.bias.reshape(out_channels, 1)

    def __call__(self, img_nchw):
        # Mirror forward(): pack the input dict, run the engine, collect the
        # outputs in output_names order, return as a list.
        inputs = {"img": img_nchw}
        y = _engine_forward(inputs["img"], self.w_lhs, self.bias_col)
        engine_outputs = {"dets": y}
        # TODO(synk): torch.cuda.device(device_id) / .detach().cpu() have no JAX
        # equivalent; device arrays are returned as-is.
        return [engine_outputs[name] for name in self.output_names]


if __name__ == "__main__":
    key = jax.random.PRNGKey(0)
    img = jax.random.normal(key, (2, 4, 16, 16), dtype=jnp.float32)  # NCHW

    model = TensorRTModelPallas(input_names=["img"], output_names=["dets"],
                                in_channels=4, out_channels=8, seed=0)
    outputs = model(img)
    outputs = [jax.block_until_ready(o) for o in outputs]

    assert outputs[0].shape == (2, 8, 16, 16)
    assert outputs[0].dtype == jnp.float32

    # Numerical cross-check against an XLA conv reference (the kernel uses bf16
    # operands with f32 accumulation, hence the loose tolerance).
    ref = jax.lax.conv_general_dilated(
        img, model.w_hwio, window_strides=(1, 1), padding="SAME",
        dimension_numbers=("NCHW", "HWIO", "NCHW"),
        precision=jax.lax.Precision.HIGHEST)
    ref = jnp.maximum(ref + model.bias.reshape(1, -1, 1, 1), 0.0)
    err = float(jnp.max(jnp.abs(outputs[0] - ref)))
    assert err < 0.1, f"mismatch vs conv reference: max abs err = {err}"

    print("KERNEL_OK")
</pallas_src>

<mosaic_0001>
module attributes {stable_mosaic.version = 11 : i64} {
  func.func @kernel(%arg0: i32, %arg1: i32, %arg2: memref<1x1x4x192xbf16, #tpu.memory_space<vmem>>, %arg3: memref<8x36xbf16, #tpu.memory_space<vmem>>, %arg4: memref<8x1xf32, #tpu.memory_space<vmem>>, %arg5: memref<1x8x128xf32, #tpu.memory_space<vmem>>) attributes {dimension_semantics = [#tpu.dimension_semantics<parallel>, #tpu.dimension_semantics<parallel>], iteration_bounds = array<i64: 2, 2>, scalar_prefetch = 0 : i64, scratch_operands = 0 : i64, tpu.core_type = #tpu.core_type<tc>, window_params = [{transform_indices = @transform_0, window_bounds = array<i64: 1, 1, 4, 192>}, {pipeline_mode = #tpu.pipeline_mode<synchronous>, transform_indices = @transform_1, window_bounds = array<i64: 8, 36>}, {pipeline_mode = #tpu.pipeline_mode<synchronous>, transform_indices = @transform_2, window_bounds = array<i64: 8, 1>}, {transform_indices = @transform_3, window_bounds = array<i64: 1, 8, 128>}]} {
    %c0 = arith.constant 0 : index
    %c0_0 = arith.constant 0 : index
    %c0_1 = arith.constant 0 : index
    %c0_2 = arith.constant 0 : index
    %0 = vector.load %arg2[%c0, %c0_0, %c0_1, %c0_2] : memref<1x1x4x192xbf16, #tpu.memory_space<vmem>>, vector<1x1x4x192xbf16>
    %1 = vector.shape_cast %0 : vector<1x1x4x192xbf16> to vector<4x192xbf16>
    %2 = tpu.iota {dimensions = array<i32: 1>} : vector<1x128xi32>
    %c16_i32 = arith.constant 16 : i32
    %c0_i32 = arith.constant 0 : i32
    %3 = arith.cmpi eq, %c16_i32, %c0_i32 : i32
    %c1_i32 = arith.constant 1 : i32
    %4 = arith.select %3, %c1_i32, %c16_i32 : i32
    %5 = vector.broadcast %4 : i32 to vector<1x128xi32>
    %6 = arith.remsi %2, %5 : vector<1x128xi32>
    %c0_i32_3 = arith.constant 0 : i32
    %7 = vector.broadcast %c0_i32_3 : i32 to vector<1x128xi32>
    %8 = arith.cmpi ne, %6, %7 : vector<1x128xi32>
    %c0_i32_4 = arith.constant 0 : i32
    %9 = vector.broadcast %c0_i32_4 : i32 to vector<1x128xi32>
    %10 = arith.cmpi slt, %6, %9 : vector<1x128xi32>
    %c0_i32_5 = arith.constant 0 : i32
    %11 = arith.cmpi slt, %4, %c0_i32_5 : i32
    %12 = vector.broadcast %11 : i1 to vector<1x128xi1>
    %13 = vector.broadcast %12 : vector<1x128xi1> to vector<1x128xi1>
    %14 = arith.xori %10, %13 : vector<1x128xi1>
    %15 = arith.andi %14, %8 : vector<1x128xi1>
    %16 = vector.broadcast %4 : i32 to vector<1x128xi32>
    %17 = arith.addi %6, %16 : vector<1x128xi32>
    %18 = arith.select %15, %17, %6 : vector<1x128xi1>, vector<1x128xi32>
    %c0_i32_6 = arith.constant 0 : i32
    %19 = vector.broadcast %c0_i32_6 : i32 to vector<1x128xi32>
    %20 = arith.cmpi ne, %18, %19 : vector<1x128xi32>
    %c15_i32 = arith.constant 15 : i32
    %21 = vector.broadcast %c15_i32 : i32 to vector<1x128xi32>
    %22 = arith.cmpi ne, %18, %21 : vector<1x128xi32>
    %23 = vector.extract_strided_slice %1 {offsets = [0, 15], sizes = [4, 128], strides = [1, 1]} : vector<4x192xbf16> to vector<4x128xbf16>
    %c0_i32_7 = arith.constant 0 : i32
    %24 = arith.sitofp %c0_i32_7 : i32 to bf16
    %25 = vector.shape_cast %20 : vector<1x128xi1> to vector<1x128xi1>
    %26 = vector.broadcast %25 : vector<1x128xi1> to vector<4x128xi1>
    %27 = vector.broadcast %24 : bf16 to vector<4x128xbf16>
    %28 = arith.select %26, %23, %27 : vector<4x128xi1>, vector<4x128xbf16>
    %29 = vector.extract_strided_slice %1 {offsets = [0, 16], sizes = [4, 128], strides = [1, 1]} : vector<4x192xbf16> to vector<4x128xbf16>
    %30 = vector.extract_strided_slice %1 {offsets = [0, 17], sizes = [4, 128], strides = [1, 1]} : vector<4x192xbf16> to vector<4x128xbf16>
    %c0_i32_8 = arith.constant 0 : i32
    %31 = arith.sitofp %c0_i32_8 : i32 to bf16
    %32 = vector.shape_cast %22 : vector<1x128xi1> to vector<1x128xi1>
    %33 = vector.broadcast %32 : vector<1x128xi1> to vector<4x128xi1>
    %34 = vector.broadcast %31 : bf16 to vector<4x128xbf16>
    %35 = arith.select %33, %30, %34 : vector<4x128xi1>, vector<4x128xbf16>
    %36 = vector.extract_strided_slice %1 {offsets = [0, 31], sizes = [4, 128], strides = [1, 1]} : vector<4x192xbf16> to vector<4x128xbf16>
    %c0_i32_9 = arith.constant 0 : i32
    %37 = arith.sitofp %c0_i32_9 : i32 to bf16
    %38 = vector.shape_cast %20 : vector<1x128xi1> to vector<1x128xi1>
    %39 = vector.broadcast %38 : vector<1x128xi1> to vector<4x128xi1>
    %40 = vector.broadcast %37 : bf16 to vector<4x128xbf16>
    %41 = arith.select %39, %36, %40 : vector<4x128xi1>, vector<4x128xbf16>
    %42 = vector.extract_strided_slice %1 {offsets = [0, 32], sizes = [4, 128], strides = [1, 1]} : vector<4x192xbf16> to vector<4x128xbf16>
    %43 = vector.extract_strided_slice %1 {offsets = [0, 33], sizes = [4, 128], strides = [1, 1]} : vector<4x192xbf16> to vector<4x128xbf16>
    %c0_i32_10 = arith.constant 0 : i32
    %44 = arith.sitofp %c0_i32_10 : i32 to bf16
    %45 = vector.shape_cast %22 : vector<1x128xi1> to vector<1x128xi1>
    %46 = vector.broadcast %45 : vector<1x128xi1> to vector<4x128xi1>
    %47 = vector.broadcast %44 : bf16 to vector<4x128xbf16>
    %48 = arith.select %46, %43, %47 : vector<4x128xi1>, vector<4x128xbf16>
    %49 = vector.extract_strided_slice %1 {offsets = [0, 47], sizes = [4, 128], strides = [1, 1]} : vector<4x192xbf16> to vector<4x128xbf16>
    %c0_i32_11 = arith.constant 0 : i32
    %50 = arith.sitofp %c0_i32_11 : i32 to bf16
    %51 = vector.shape_cast %20 : vector<1x128xi1> to vector<1x128xi1>
    %52 = vector.broadcast %51 : vector<1x128xi1> to vector<4x128xi1>
    %53 = vector.broadcast %50 : bf16 to vector<4x128xbf16>
    %54 = arith.select %52, %49, %53 : vector<4x128xi1>, vector<4x128xbf16>
    %55 = vector.extract_strided_slice %1 {offsets = [0, 48], sizes = [4, 128], strides = [1, 1]} : vector<4x192xbf16> to vector<4x128xbf16>
    %56 = vector.extract_strided_slice %1 {offsets = [0, 49], sizes = [4, 128], strides = [1, 1]} : vector<4x192xbf16> to vector<4x128xbf16>
    %c0_i32_12 = arith.constant 0 : i32
    %57 = arith.sitofp %c0_i32_12 : i32 to bf16
    %58 = vector.shape_cast %22 : vector<1x128xi1> to vector<1x128xi1>
    %59 = vector.broadcast %58 : vector<1x128xi1> to vector<4x128xi1>
    %60 = vector.broadcast %57 : bf16 to vector<4x128xbf16>
    %61 = arith.select %59, %56, %60 : vector<4x128xi1>, vector<4x128xbf16>
    %62 = tpu.concatenate %28, %29, %35, %41, %42, %48, %54, %55, %61 in 0 : vector<4x128xbf16>, vector<4x128xbf16>, vector<4x128xbf16>, vector<4x128xbf16>, vector<4x128xbf16>, vector<4x128xbf16>, vector<4x128xbf16>, vector<4x128xbf16>, vector<4x128xbf16> -> vector<36x128xbf16>
    %c0_13 = arith.constant 0 : index
    %c0_14 = arith.constant 0 : index
    %63 = vector.load %arg3[%c0_13, %c0_14] : memref<8x36xbf16, #tpu.memory_space<vmem>>, vector<8x36xbf16>
    %cst = arith.constant dense<0.000000e+00> : vector<8x128xf32>
    %64 = tpu.matmul %63, %62, %cst {dimension_numbers = #tpu.dot_dimension_numbers<[1], [0], [0], [1], [0, 0, 1, 1], [], []>} : vector<8x36xbf16>, vector<36x128xbf16>, vector<8x128xf32> -> vector<8x128xf32>
    %c0_15 = arith.constant 0 : index
    %c0_16 = arith.constant 0 : index
    %65 = vector.load %arg4[%c0_15, %c0_16] : memref<8x1xf32, #tpu.memory_space<vmem>>, vector<8x1xf32>
    %66 = vector.broadcast %65 : vector<8x1xf32> to vector<8x128xf32>
    %67 = arith.addf %64, %66 : vector<8x128xf32>
    %cst_17 = arith.constant 0.000000e+00 : f32
    %68 = vector.broadcast %cst_17 : f32 to vector<8x128xf32>
    %69 = arith.maximumf %67, %68 : vector<8x128xf32>
    %70 = vector.shape_cast %69 : vector<8x128xf32> to vector<1x8x128xf32>
    %c0_18 = arith.constant 0 : index
    %c0_19 = arith.constant 0 : index
    %c0_20 = arith.constant 0 : index
    %71 = vector.load %arg5[%c0_18, %c0_19, %c0_20] : memref<1x8x128xf32, #tpu.memory_space<vmem>>, vector<1x8x128xf32>
    tpu.vector_store %arg5[%c0_18, %c0_19, %c0_20], %70 {strides = array<i32>} : memref<1x8x128xf32, #tpu.memory_space<vmem>>, vector<1x8x128xf32>,
    return
  }
  func.func @transform_0(%arg0: i32, %arg1: i32) -> (i32, i32, i32, i32) {
    %c0_i32 = arith.constant 0 : i32
    %c0_i32_0 = arith.constant 0 : i32
    %c0_i32_1 = arith.constant 0 : i32
    return %arg0, %arg1, %c0_i32, %c0_i32_0 : i32, i32, i32, i32
  }
  func.func @transform_1(%arg0: i32, %arg1: i32) -> (i32, i32) {
    %c0_i32 = arith.constant 0 : i32
    %c0_i32_0 = arith.constant 0 : i32
    %c0_i32_1 = arith.constant 0 : i32
    return %c0_i32, %c0_i32_0 : i32, i32
  }
  func.func @transform_2(%arg0: i32, %arg1: i32) -> (i32, i32) {
    %c0_i32 = arith.constant 0 : i32
    %c0_i32_0 = arith.constant 0 : i32
    %c0_i32_1 = arith.constant 0 : i32
    return %c0_i32, %c0_i32_0 : i32, i32
  }
  func.func @transform_3(%arg0: i32, %arg1: i32) -> (i32, i32, i32) {
    %c0_i32 = arith.constant 0 : i32
    %c0_i32_0 = arith.constant 0 : i32
    return %arg0, %c0_i32, %arg1 : i32, i32, i32
  }
}

</mosaic_0001>

<llo_original>
// kernel: _engine_forward.1
$region0: #{_engine_forward.1}
  #allocation0 [shape = 'u32[]', space=smem, size = 0x4, offset = 0x4, fixed_abs, tag = 'smem constant byte address 0x4 - core index']
  #allocation1 [shape = 'u32[144,128]{1,0:T(1,128)}', space=vmem, size = 0x12000, scoped, tag = 'internal scratch']
  %s0 = inlined_call_operand.vmem [shape: bf16[2,2,4,192], index: 0, kind: input, shape index: {}]
  %s1 = inlined_call_operand.vmem [shape: bf16[8,36], index: 1, kind: input, shape index: {}]
  %s2 = inlined_call_operand.vmem [shape: f32[8,1], index: 2, kind: input, shape index: {}]
  %s3 = inlined_call_operand.vmem [shape: f32[2,8,256], index: 3, kind: output, shape index: {}]
  %s4 = sld [smem:[#allocation0]]
  $region45: #{_engine_forward.1} parent=0
    _
  %s6 = ssub.s32 1, %s4
  %s7 = scalar_select 0, %s6, %s4
  loop: start=0, step=1, limit=6
  $region2: #{_engine_forward.1} parent=0 // loop_pre_header
    _
  $region3: #{_engine_forward.1} parent=0 // loop_header
    %s9 = sphi 0, %s13
    %p10 = scmp.ge.s32.totalorder %s9, 6
    %s16 = sphi 0, %s28
    %s17 = sphi 0, %s24
    %s18 = sphi 0, %s16
    %s19 = sphi 0, %s17
    %s20 = sphi 0, %s18
    %s21 = sphi 0, %s19
    %s33 = sphi 0, %s35
    %s36 = sphi 0, %s33
    %s37 = sphi 0, %s36
    %s53 = sphi 0, %s37
    %s57 = sphi 0, %s57
    %s59 = sphi 0, %s57
    %s60 = sphi 0, %s59
    %s74 = sphi 0, %s60
    %s78 = sphi 0, %s78
    %s80 = sphi 0, %s78
    %s81 = sphi 0, %s80
    %s95 = sphi 0, %s81
    %s103 = sphi 0, %s105
    %s106 = sphi 0, %s103
    %s107 = sphi 0, %s106
    %s123 = sphi 0, %s107
  $region4: #{_engine_forward.1} parent=0 // loop_header_branch
    %12 = sbr.rel (%p10) target = $region8
  $region5: #{_engine_forward.1} parent=0 // loop_body
    %s14 = ssub.s32 %s9, 1
    %s15 = ssub.s32 %s9, 2
    %s22 = sadd.s32 1, %s17
    %p23 = scmp.ge.s32.totalorder %s22, 2
    %s24 = scalar_select %p23, 0, %s22
    %s25 = sadd.s32 1, %s16
    %s26 = scalar_select %p23, %s25, %s16
    %p27 = scmp.ge.s32.totalorder %s26, 2
    %s28 = scalar_select %p27, 0, %s26
    %s29 = ssub.s32 %s16, %s28
    %s30 = ssub.s32 %s17, %s24
    %s31 = sor.u32 %s29, %s30
    %p32 = scmp.eq.s32.totalorder %s31, 0
    %s34 = sadd.s32 %s33, 1
    %s35 = scalar_select %p32, %s33, %s34
    %p38 = pneg %p32
    %p39 = scmp.eq.s32.totalorder %s9, 3
    %p40 = por %p38, %p39
    %p41 = scmp.ne.s32.totalorder %s33, %s36
    %p42 = scmp.eq.s32.totalorder %s9, 0
    %p43 = por %p41, %p42
    %p44 = scmp.ne.s32.totalorder %s33, %s36
    %p45 = scmp.eq.s32.totalorder %s14, 3
    %p46 = por %p44, %p45
    %p47 = scmp.ne.s32.totalorder %s36, %s37
    %p48 = scmp.eq.s32.totalorder %s14, 0
    %p49 = por %p47, %p48
    %p50 = scmp.ne.s32.totalorder %s36, %s37
    %p51 = scmp.eq.s32.totalorder %s15, 3
    %p52 = por %p50, %p51
    %p54 = scmp.ne.s32.totalorder %s37, %s53
    %p55 = scmp.eq.s32.totalorder %s15, 0
    %p56 = por %p54, %p55
    %s58 = sadd.s32 %s57, 1
    %p61 = scmp.eq.s32.totalorder %s9, 3
    %p62 = scmp.ne.s32.totalorder %s57, %s59
    %p63 = scmp.eq.s32.totalorder %s9, 0
    %p64 = por %p62, %p63
    %p65 = scmp.ne.s32.totalorder %s57, %s59
    %p66 = scmp.eq.s32.totalorder %s14, 3
    %p67 = por %p65, %p66
    %p68 = scmp.ne.s32.totalorder %s59, %s60
    %p69 = scmp.eq.s32.totalorder %s14, 0
    %p70 = por %p68, %p69
    %p71 = scmp.ne.s32.totalorder %s59, %s60
    %p72 = scmp.eq.s32.totalorder %s15, 3
    %p73 = por %p71, %p72
    %p75 = scmp.ne.s32.totalorder %s60, %s74
    %p76 = scmp.eq.s32.totalorder %s15, 0
    %p77 = por %p75, %p76
    %s79 = sadd.s32 %s78, 1
    %p82 = scmp.eq.s32.totalorder %s9, 3
    %p83 = scmp.ne.s32.totalorder %s78, %s80
    %p84 = scmp.eq.s32.totalorder %s9, 0
    %p85 = por %p83, %p84
    %p86 = scmp.ne.s32.totalorder %s78, %s80
    %p87 = scmp.eq.s32.totalorder %s14, 3
    %p88 = por %p86, %p87
    %p89 = scmp.ne.s32.totalorder %s80, %s81
    %p90 = scmp.eq.s32.totalorder %s14, 0
    %p91 = por %p89, %p90
    %p92 = scmp.ne.s32.totalorder %s80, %s81
    %p93 = scmp.eq.s32.totalorder %s15, 3
    %p94 = por %p92, %p93
    %p96 = scmp.ne.s32.totalorder %s81, %s95
    %p97 = scmp.eq.s32.totalorder %s15, 0
    %p98 = por %p96, %p97
    %s99 = ssub.s32 %s16, %s28
    %s100 = ssub.s32 %s17, %s24
    %s101 = sor.u32 %s99, %s100
    %p102 = scmp.eq.s32.totalorder %s101, 0
    %s104 = sadd.s32 %s103, 1
    %s105 = scalar_select %p102, %s103, %s104
    %p108 = pneg %p102
    %p109 = scmp.eq.s32.totalorder %s9, 3
    %p110 = por %p108, %p109
    %p111 = scmp.ne.s32.totalorder %s103, %s106
    %p112 = scmp.eq.s32.totalorder %s9, 0
    %p113 = por %p111, %p112
    %p114 = scmp.ne.s32.totalorder %s103, %s106
    %p115 = scmp.eq.s32.totalorder %s14, 3
    %p116 = por %p114, %p115
    %p117 = scmp.ne.s32.totalorder %s106, %s107
    %p118 = scmp.eq.s32.totalorder %s14, 0
    %p119 = por %p117, %p118
    %p120 = scmp.ne.s32.totalorder %s106, %s107
    %p121 = scmp.eq.s32.totalorder %s15, 3
    %p122 = por %p120, %p121
    %p124 = scmp.ne.s32.totalorder %s107, %s123
    %p125 = scmp.eq.s32.totalorder %s15, 0
    %p126 = por %p124, %p125
    %p127 = scmp.le.s32.totalorder 1, %s9
    %p128 = scmp.lt.s32.totalorder %s9, 5
    %p129 = pnand %p127, %p128
    %p130 = pneg %p129
    // Predicated region
    $region9: #{_engine_forward.1} parent=5 // pred_check
      _
    $region10: #{_engine_forward.1} parent=5 // pred_check_branch
      %132 = sbr.rel (%p129) target = $region12
    $region11: #{_engine_forward.1} parent=5 // pred_region
      %s133 = ssub.s32 %s9, 1
      // Predicated region
      $region13: #{_engine_forward.1} parent=11 // pred_check
        %p134 = pneg %p70
      $region14: #{_engine_forward.1} parent=11 // pred_check_branch
        %136 = sbr.rel (%p134) target = $region16
      $region15: #{_engine_forward.1} parent=11 // pred_region
        _
      $region16: #{_engine_forward.1} parent=11 // pred_fallthru
        _
      // Predicated region
      $region17: #{_engine_forward.1} parent=11 // pred_check
        %p137 = pneg %p91
      $region18: #{_engine_forward.1} parent=11 // pred_check_branch
        %139 = sbr.rel (%p137) target = $region20
      $region19: #{_engine_forward.1} parent=11 // pred_region
        _
      $region20: #{_engine_forward.1} parent=11 // pred_fallthru
        _
    $region12: #{_engine_forward.1} parent=5 // pred_fallthru
      _
    %p140 = scmp.lt.s32.totalorder %s9, 4
    // Predicated region
    $region21: #{_engine_forward.1} parent=5 // pred_check
      %p141 = pneg %p140
    $region22: #{_engine_forward.1} parent=5 // pred_check_branch
      %143 = sbr.rel (%p141) target = $region24
    $region23: #{_engine_forward.1} parent=5 // pred_region
      // Predicated region
      $region25: #{_engine_forward.1} parent=23 // pred_check
        %p144 = pneg %p43
      $region26: #{_engine_forward.1} parent=23 // pred_check_branch
        %146 = sbr.rel (%p144) target = $region28
      $region27: #{_engine_forward.1} parent=23 // pred_region
        %p147 = scmp.lt.s32.totalorder %s16, 1
        %s148 = scalar_select %p147, %s16, 1
        %p149 = scmp.lt.s32.totalorder %s17, 1
        %s150 = scalar_select %p149, %s17, 1
        %s151 = smul.addr %s150, 2
        %s152 = smul.addr %s148, 4
        %s153 = sadd.s32 %s151, %s152
        %s154 = smul.addr %s153, 2
        %s155 = scalar_lea.vmem %s0, %s154
      $region28: #{_engine_forward.1} parent=23 // pred_fallthru
        _
    $region24: #{_engine_forward.1} parent=5 // pred_fallthru
      _
    %p156 = scmp.le.s32.totalorder 1, %s9
    %p157 = scmp.lt.s32.totalorder %s9, 5
    %p158 = pnand %p156, %p157
    %p159 = pneg %p158
    // Predicated region
    $region29: #{_engine_forward.1} parent=5 // pred_check
      _
    $region30: #{_engine_forward.1} parent=5 // pred_check_branch
      %161 = sbr.rel (%p158) target = $region32
    $region31: #{_engine_forward.1} parent=5 // pred_region
      %s162 = ssub.s32 %s9, 1
      %p163 = scmp.lt.s32.totalorder %s18, 1
      %s164 = scalar_select %p163, %s18, 1
      %p165 = scmp.lt.s32.totalorder %s19, 1
      %s166 = scalar_select %p165, %s19, 1
      %s167 = smul.addr %s166, 2
      %s168 = smul.addr %s164, 4
      %s169 = sadd.s32 %s167, %s168
      %s170 = smul.addr %s169, 2
      %s171 = scalar_lea.vmem %s0, %s170
      %p172 = pneg %p49
      %p173 = pneg %p46
      %p174 = pneg %p70
      %p175 = pneg %p67
      %p176 = pneg %p91
      %p177 = pneg %p88
      %p178 = pneg %p119
      %p179 = pneg %p116
      %p180 = scmp.lt.s32.totalorder %s18, 1
      %s181 = scalar_select %p180, %s18, 1
      %p182 = scmp.lt.s32.totalorder %s19, 1
      %s183 = scalar_select %p182, %s19, 1
      %s184 = smul.addr %s181, 2
      %s185 = sadd.s32 %s183, %s184
      %s186 = smul.addr %s185, 8
      %s187 = scalar_lea.vmem %s3, %s186
      %p188 = scmp.lt.s32.totalorder %s18, 1
      %s189 = scalar_select %p188, %s18, 1
      %p190 = scmp.lt.s32.totalorder %s19, 1
      %s191 = scalar_select %p190, %s19, 1
      %s192 = smul.addr %s191, 2
      %s193 = smul.addr %s189, 4
      %s194 = sadd.s32 %s192, %s193
      %s195 = smul.addr %s194, 2
      %s196 = scalar_lea.vmem %s0, %s195
      %p197 = scmp.lt.s32.totalorder %s18, 1
      %s198 = scalar_select %p197, %s18, 1
      %p199 = scmp.lt.s32.totalorder %s19, 1
      %s200 = scalar_select %p199, %s19, 1
      %s201 = smul.addr %s198, 2
      %s202 = sadd.s32 %s200, %s201
      %s203 = smul.addr %s202, 8
      %s204 = scalar_lea.vmem %s3, %s203
      %v208 = vld [vmem:[%s196] sm:$0xf]
      %v209 = vlaneseq
      %v210 = vand.u32 %v209, 127
      %vm211 = vcmp.lt.s32.totalorder %v210, 0
      %v212 = vsub.s32 0, %v210
      %v213 = vsel %vm211, %v212, %v210
      %v214 = vshrl.u32 %v213, 4
      %v215 = vand.u32 %v213, 15
      %v216 = vsub.s32 0, %v215
      %v217 = vsel %vm211, %v216, %v215
      %vm218 = vcmp.ne.s32.totalorder %v217, 0
      %vm219 = vcmp.lt.s32.totalorder %v217, 0
      %vm220 = vmand %vm219, %vm218
      %v221 = vadd.s32 %v217, 16
      %v222 = vsel %vm220, %v221, %v217
      %vm223 = vcmp.ne.s32.totalorder %v222, 0
      %vm224 = vcmp.ne.s32.totalorder %v222, 15
      %v225 = vsel %vm223, 1, 0
      %vm226 = vcmp.eq.s32.totalorder %v225, 1
      %v227 = vsel %vm226, 1, 0
      %v228 = vpack.c.b16 %v227, %v227
      %vm229 = vcmp.ne.s16.totalorder %v228, 0
      %v230 = vsel %vm229, 65537, 0
      %231 = vrot.lane.b32.xlu0 %v230, 15
      %v232 = vpop.permute.xlu0 %231
      %v233 = vrot.slane %v232, 6
      %vm234 = vcmask 121856
      %v235 = vsel %vm234, %v233, %v232
      %vm236 = vcmp.ne.s16.totalorder %v235, 0
      %v237 = vsel %vm236, %v208, 0
      %v238 = vsel %vm224, 1, 0
      %vm239 = vcmp.eq.s32.totalorder %v238, 1
      %v240 = vsel %vm239, 1, 0
      %v241 = vpack.c.b16 %v240, %v240
      %vm242 = vcmp.ne.s16.totalorder %v241, 0
      %v243 = vsel %vm242, 65537, 0
      %244 = vrot.lane.b32.xlu0 %v243, 17
      %v245 = vpop.permute.xlu0 %244
      %v246 = vrot.slane %v245, 6
      %vm247 = vcmask 138240
      %v248 = vsel %vm247, %v246, %v245
      %vm249 = vcmp.ne.s16.totalorder %v248, 0
      %v250 = vsel %vm249, %v208, 0
      %251 = vrot.lane.b32.xlu0 %v230, 31
      %v252 = vpop.permute.xlu0 %251
      %v253 = vrot.slane %v252, 6
      %vm254 = vcmask 252928
      %v255 = vsel %vm254, %v253, %v252
      %vm256 = vcmp.ne.s16.totalorder %v255, 0
      %v257 = vsel %vm256, %v208, 0
      %258 = vrot.lane.b32.xlu0 %v243, 33
      %v259 = vpop.permute.xlu0 %258
      %v260 = vrot.slane %v259, 6
      %vm261 = vcmask 269312
      %v262 = vsel %vm261, %v260, %v259
      %vm263 = vcmp.ne.s16.totalorder %v262, 0
      %v264 = vsel %vm263, %v208, 0
      %265 = vrot.lane.b32.xlu0 %v230, 47
      %v266 = vpop.permute.xlu0 %265
      %v267 = vrot.slane %v266, 6
      %vm268 = vcmask 384000
      %v269 = vsel %vm268, %v267, %v266
      %vm270 = vcmp.ne.s16.totalorder %v269, 0
      %v271 = vsel %vm270, %v208, 0
      %272 = vrot.lane.b32.xlu0 %v243, 49
      %v273 = vpop.permute.xlu0 %272
      %v274 = vrot.slane %v273, 6
      %vm275 = vcmask 400384
      %v276 = vsel %vm275, %v274, %v273
      %vm277 = vcmp.ne.s16.totalorder %v276, 0
      %v278 = vsel %vm277, %v208, 0
      %v281 = vunpack.c.l.s4 1983009808
      %v282 = vunpack.c.0.s8 %v281
      %v283 = vlaneseq
      %v284 = vshrl.u32 %v283, 7
      %v285 = vsub.s32 %v282, %v284
      %v286 = vrot.slane %v237, %v285
      %v287 = vcombine.high %v286, %v286
      %v289 = vcombine.low %v208, %v208
      %v291 = vunpack.c.l.s4 1983009808
      %v292 = vunpack.c.0.s8 %v291
      %v293 = vlaneseq
      %v294 = vshrl.u32 %v293, 7
      %v295 = vsub.s32 %v292, %v294
      %v296 = vrot.slane %v289, %v295
      %v298 = vunpack.c.l.s4 1983009808
      %v299 = vunpack.c.0.s8 %v298
      %v300 = vlaneseq
      %v301 = vshrl.u32 %v300, 7
      %v302 = vsub.s32 %v299, %v301
      %v303 = vrot.slane %v208, %v302
      %v304 = vcombine.high %v296, %v296
      %305 = vrot.lane.b32.xlu0 %v296, 127
      %v306 = vpop.permute.xlu0 %305
      %307 = vrot.lane.b32.xlu0 %v304, 127
      %v308 = vpop.permute.xlu0 %307
      %vm309 = vcmask 1039360
      %v310 = vsel %vm309, %v306, %v308
      %v313 = vunpack.c.l.s4 1983009808
      %v314 = vunpack.c.0.s8 %v313
      %v315 = vlaneseq
      %v316 = vshrl.u32 %v315, 7
      %v317 = vsub.s32 %v314, %v316
      %v318 = vrot.slane %v250, %v317
      %v319 = vcombine.low %v318, %v318
      %320 = vrot.lane.b32.xlu0 %v319, 126
      %v321 = vpop.permute.xlu0 %320
      %322 = vrot.lane.b32.xlu0 %v318, 126
      %v323 = vpop.permute.xlu0 %322
      %vm324 = vcmask 1031168
      %v325 = vsel %vm324, %v321, %v323
      %v327 = vcombine.low %v257, %v257
      %v329 = vunpack.c.l.s4 1983009808
      %v330 = vunpack.c.0.s8 %v329
      %v331 = vlaneseq
      %v332 = vshrl.u32 %v331, 7
      %v333 = vsub.s32 %v330, %v332
      %v334 = vrot.slane %v327, %v333
      %v335 = vcombine.low %v334, %v334
      %336 = vrot.lane.b32.xlu0 %v335, 112
      %v337 = vpop.permute.xlu0 %336
      %338 = vrot.lane.b32.xlu0 %v334, 112
      %v339 = vpop.permute.xlu0 %338
      %vm340 = vcmask 916480
      %v341 = vsel %vm340, %v337, %v339
      %v342 = vcombine.high %v303, %v303
      %343 = vrot.lane.b32.xlu0 %v303, 111
      %v344 = vpop.permute.xlu0 %343
      %345 = vrot.lane.b32.xlu0 %v342, 111
      %v346 = vpop.permute.xlu0 %345
      %vm347 = vcmask 908288
      %v348 = vsel %vm347, %v344, %v346
      %v350 = vcombine.low %v264, %v264
      %v352 = vunpack.c.l.s4 1983009808
      %v353 = vunpack.c.0.s8 %v352
      %v354 = vlaneseq
      %v355 = vshrl.u32 %v354, 7
      %v356 = vsub.s32 %v353, %v355
      %v357 = vrot.slane %v350, %v356
      %v358 = vcombine.high %v357, %v357
      %359 = vrot.lane.b32.xlu0 %v357, 110
      %v360 = vpop.permute.xlu0 %359
      %361 = vrot.lane.b32.xlu0 %v358, 110
      %v362 = vpop.permute.xlu0 %361
      %vm363 = vcmask 900096
      %v364 = vsel %vm363, %v360, %v362
      %v367 = vunpack.c.l.s4 1983009808
      %v368 = vunpack.c.0.s8 %v367
      %v369 = vlaneseq
      %v370 = vshrl.u32 %v369, 7
      %v371 = vsub.s32 %v368, %v370
      %v372 = vrot.slane %v271, %v371
      %v373 = vcombine.low %v372, %v372
      %374 = vrot.lane.b32.xlu0 %v373, 96
      %v375 = vpop.permute.xlu0 %374
      %376 = vrot.lane.b32.xlu0 %v372, 96
      %v377 = vpop.permute.xlu0 %376
      %vm378 = vcmask 785408
      %v379 = vsel %vm378, %v375, %v377
      %v380 = vcombine.low %v296, %v296
      %381 = vrot.lane.b32.xlu0 %v380, 95
      %v382 = vpop.permute.xlu0 %381
      %383 = vrot.lane.b32.xlu0 %v296, 95
      %v384 = vpop.permute.xlu0 %383
      %vm385 = vcmask 777216
      %v386 = vsel %vm385, %v382, %v384
      %v389 = vunpack.c.l.s4 1983009808
      %v390 = vunpack.c.0.s8 %v389
      %v391 = vlaneseq
      %v392 = vshrl.u32 %v391, 7
      %v393 = vsub.s32 %v390, %v392
      %v394 = vrot.slane %v278, %v393
      %v395 = vcombine.high %v394, %v394
      %396 = vrot.lane.b32.xlu0 %v394, 94
      %v397 = vpop.permute.xlu0 %396
      %398 = vrot.lane.b32.xlu0 %v395, 94
      %v399 = vpop.permute.xlu0 %398
      %vm400 = vcmask 769024
      %v401 = vsel %vm400, %v397, %v399
      %vm402 = vcmask 1041408
      %v405 = vsel %vm402, %v286, %v310
      %v408 = vsel %vm402, %v287, %v308
      %vm409 = vcmask 1043456
      %v411 = vsel %vm409, %v405, %v325
      %v413 = vsel %vm409, %v408, %v323
      %vm414 = vcmask 1045504
      %v416 = vsel %vm414, %v411, %v341
      %v418 = vsel %vm414, %v413, %v339
      %v421 = vsel %vm402, %v348, %v364
      %v424 = vsel %vm402, %v346, %v362
      %v426 = vsel %vm409, %v421, %v379
      %v428 = vsel %vm409, %v424, %v377
      %v430 = vsel %vm414, %v426, %v386
      %v432 = vsel %vm414, %v428, %v384
      %v433 = vld [vmem:[%s1] sm:$0xf]
      %v434 = vld [vmem:[%s2] sm:$0xff]
      %436 = vset.pattern.permute.xlu0 0
      %437 = vperm.xlu0 %436, %v434
      %v438 = vpop.permute.xlu0 %437
      %444 = vrot.lane.b32.xlu0 %v416, 113
      %v445 = vpop.permute.xlu0 %444
      %446 = vrot.lane.b32.xlu0 %v418, 113
      %v447 = vpop.permute.xlu0 %446
      %448 = vrot.lane.b32.xlu0 %v430, 113
      %v449 = vpop.permute.xlu0 %448
      %450 = vrot.lane.b32.xlu0 %v432, 113
      %v451 = vpop.permute.xlu0 %450
      %452 = vrot.lane.b32.xlu0 %v401, 113
      %v453 = vpop.permute.xlu0 %452
      %454 = vrot.lane.b32.xlu0 %v399, 113
      %v455 = vpop.permute.xlu0 %454
      %vm456 = vcmask 924672
      %v457 = vsel %vm456, %v445, %v447
      %v458 = vsel %vm456, %v449, %v451
      %v459 = vsel %vm456, %v453, %v455
      %vm462 = vcmask 293888
      %v464 = vsel %vm462, %v433, 0
      %v467 = vsel %vm402, %v459, 0
      %469 = vmatprep.subr.bf16.mxu0 0
      %470 = vmatpush1.bf16.msra.mxu0 0
      %471 = vmatprep.subr.bf16.mxu0 0
      %472 = vmatpush1.bf16.msra.mxu0 0
      %473 = vmatprep.subr.bf16.mxu0 0
      %474 = vmatpush1.bf16.msra.mxu0 0
      %475 = vmatprep.subr.bf16.mxu0 0
      %476 = vmatpush1.bf16.msra.mxu0 0
      %477 = vmatprep.subr.bf16.mxu0 0
      %478 = vmatpush1.bf16.msra.mxu0 0
      %479 = vmatprep.subr.bf16.mxu0 0
      %480 = vmatpush1.bf16.msra.mxu0 %v467
      %481 = vmatprep.subr.bf16.mxu0 0
      %482 = vmatpush1.bf16.msra.mxu0 %v458
      %483 = vmatprep.subr.bf16.mxu0 0
      %484 = vmatpush1.bf16.msra.mxu0 %v457
      %485 = vmatprep.subr.bf16.mxu0 0
      %486 = vmatpush2.bf16.msra.mxu0 0
      %487 = vmatprep.subr.bf16.mxu0 0
      %488 = vmatpush2.bf16.msra.mxu0 0
      %489 = vmatprep.subr.bf16.mxu0 0
      %490 = vmatpush2.bf16.msra.mxu0 0
      %491 = vmatprep.subr.bf16.mxu0 0
      %492 = vmatpush2.bf16.msra.mxu0 0
      %493 = vmatprep.subr.bf16.mxu0 0
      %494 = vmatpush2.bf16.msra.mxu0 0
      %495 = vmatprep.subr.bf16.mxu0 0
      %496 = vmatpush2.bf16.msra.mxu0 0
      %497 = vmatprep.subr.bf16.mxu0 0
      %498 = vmatpush2.bf16.msra.mxu0 0
      %499 = vmatprep.subr.bf16.mxu0 0
      %500 = vmatpush2.bf16.msra.mxu0 0
      %501 = vmatprep.mubr.bf16.mxu0 0
      %502 = vmatmul.mubr.bf16.gmra.mxu0 %v464
      %v503 = vpop.f32.mrf.mxu0
      %v504 = vadd.f32 %v438, %v503
      %v505 = vpop.f32.mrf.mxu0
      %v506 = vpop.f32.mrf.mxu0
      %v507 = vpop.f32.mrf.mxu0
      %508 = vdwg.mxu0
      %v509 = vmax.f32 %v504, 0.0
      %510 = vst [vmem:[%s204] sm:$0xff] %v509
      %p511 = scmp.lt.s32.totalorder %s18, 1
      %s512 = scalar_select %p511, %s18, 1
      %p513 = scmp.lt.s32.totalorder %s19, 1
      %s514 = scalar_select %p513, %s19, 1
      %s515 = smul.addr %s512, 2
      %s516 = sadd.s32 %s514, %s515
      %s517 = smul.addr %s516, 8
      %s518 = scalar_lea.vmem %s3, %s517
      // Predicated region
      $region33: #{_engine_forward.1} parent=31 // pred_check
        %p519 = pneg %p116
      $region34: #{_engine_forward.1} parent=31 // pred_check_branch
        %521 = sbr.rel (%p519) target = $region36
      $region35: #{_engine_forward.1} parent=31 // pred_region
        _
      $region36: #{_engine_forward.1} parent=31 // pred_fallthru
        _
    $region32: #{_engine_forward.1} parent=5 // pred_fallthru
      _
    %p522 = scmp.le.s32.totalorder 2, %s9
    // Predicated region
    $region37: #{_engine_forward.1} parent=5 // pred_check
      %p523 = pneg %p522
    $region38: #{_engine_forward.1} parent=5 // pred_check_branch
      %525 = sbr.rel (%p523) target = $region40
    $region39: #{_engine_forward.1} parent=5 // pred_region
      %s526 = ssub.s32 %s9, 2
      // Predicated region
      $region41: #{_engine_forward.1} parent=39 // pred_check
        %p527 = pneg %p122
      $region42: #{_engine_forward.1} parent=39 // pred_check_branch
        %529 = sbr.rel (%p527) target = $region44
      $region43: #{_engine_forward.1} parent=39 // pred_region
        %p530 = scmp.lt.s32.totalorder %s20, 1
        %s531 = scalar_select %p530, %s20, 1
        %p532 = scmp.lt.s32.totalorder %s21, 1
        %s533 = scalar_select %p532, %s21, 1
        %s534 = smul.addr %s531, 2
        %s535 = sadd.s32 %s533, %s534
        %s536 = smul.addr %s535, 8
        %s537 = scalar_lea.vmem %s3, %s536
      $region44: #{_engine_forward.1} parent=39 // pred_fallthru
        _
    $region40: #{_engine_forward.1} parent=5 // pred_fallthru
      _
  $region6: #{_engine_forward.1} parent=0 // loop_footer
    %s13 = sadd.s32 1, %s9
  $region7: #{_engine_forward.1} parent=0 // loop_footer_branch
    %8 = sbr.rel target = $region3
  $region8: #{_engine_forward.1} parent=0 // loop_exit
    _

</llo_original>
